<compile_context>
chip_gen: v5e
topology: v5e:2x2
jax: 0.10.0
libtpu: 0.0.40
codegen_flags: <defaults>
</compile_context>

<pallas_src>
import jax
import jax.numpy as jnp
from jax.experimental import pallas as pl
from jax.experimental.pallas import tpu as pltpu

EPS = 1e-5                      # PyTorch BatchNorm2d default eps
LANES = 128
_TARGET_BLOCK_BYTES = 1 << 21   # ~2 MiB logical block (mem-bound sweet spot,
                                # safe for v5e scoped VMEM once double-buffered)


# ---------------------------------------------------------------------------
# Kernel
# ---------------------------------------------------------------------------
def _fused_conv_bn_kernel(p_ref, x_ref, o_ref):
    """p_ref: SMEM (C*C + C,) f32 = [ (diag(g1*g2)@Wconv + I) row-major | shift ]
       x_ref / o_ref: VMEM (1, C, s_t, 128) blocks of the (N, C, HW/128, 128) view."""
    c = x_ref.shape[1]
    bt = x_ref.shape[0]

    # Hoist the 12 SMEM scalar reads out of the unrolled loops.
    m = [[p_ref[co * c + ci] for ci in range(c)] for co in range(c)]
    sh = [p_ref[c * c + co] for co in range(c)]

    for b in range(bt):                                   # bt == 1, static unroll
        xs = [x_ref[b, ci] for ci in range(c)]            # each (s_t, 128), loaded once
        for co in range(c):
            acc = xs[0] * m[co][0]
            for ci in range(1, c):
                acc = acc + xs[ci] * m[co][ci]
            o_ref[b, co] = acc + sh[co]


# ---------------------------------------------------------------------------
# Wrapper
# ---------------------------------------------------------------------------
def _fold_params(params, c):
    """Fold conv1 + bn + bn2 + residual identity into (Mp, shift), packed flat."""
    wc, cb, w1, b1, m1, v1, w2, b2, m2, v2 = [p.astype(jnp.float32) for p in params]
    g1 = w1 * jax.lax.rsqrt(v1 + EPS)                      # (C,)
    g2 = w2 * jax.lax.rsqrt(v2 + EPS)                      # (C,)
    a = g1 * g2                                            # (C,)
    mat = a[:, None] * wc                                  # (C, C) conv ∘ bn ∘ bn2
    shift = a * cb + g2 * (b1 - g1 * m1) + (b2 - g2 * m2)  # (C,)
    m_plus_i = mat + jnp.eye(c, dtype=jnp.float32)         # + identity (the "+ inp")
    return jnp.concatenate([m_plus_i.reshape(-1), shift])  # (C*C + C,)


def _choose_row_tile(rows, c, itemsize=4, target_bytes=_TARGET_BLOCK_BYTES):
    """Pick s_t (sublane rows per block): multiple of 8, block ≈ target bytes."""
    row_bytes = c * LANES * itemsize                # one 128-lane row across channels
    s_t = (target_bytes // row_bytes) // 8 * 8      # ~2 MiB worth of rows
    rows_up8 = (rows + 7) // 8 * 8
    return max(8, min(s_t, rows_up8))


def create_model_3_forward(inp, params):
    """inp: (N, C, H, W) float32 (NCHW, like PyTorch). C must match Conv2d(3,3)."""
    n, c, h, w = inp.shape
    hw = h * w
    packed = _fold_params(params, c)

    # Dense (8,128)-friendly view: (N, C, rows, 128) with rows padded so that
    # the row-tile s_t divides it exactly (no masked tail path in the kernel).
    rows = (hw + LANES - 1) // LANES
    s_t = _choose_row_tile(rows, c)
    rows_pad = (rows + s_t - 1) // s_t * s_t
    hw_pad = rows_pad * LANES

    x = inp.reshape(n, c, hw).astype(jnp.float32)
    if hw_pad != hw:
        x = jnp.pad(x, ((0, 0), (0, 0), (0, hw_pad - hw)))
    x4 = x.reshape(n, c, rows_pad, LANES)

    grid = (n, rows_pad // s_t)                     # n>=2 or multiple row tiles
    spec = pl.BlockSpec((1, c, s_t, LANES), lambda i, j, p: (i, 0, j, 0))

    block_bytes = c * s_t * LANES * 4
    # Double-buffered in + out (4 buffers) plus slack; fits every chip's scoped VMEM.
    vmem_limit = min(48 * 1024 * 1024,
                     max(16 * 1024 * 1024, 4 * block_bytes + 4 * 1024 * 1024))

    out = pl.pallas_call(
        _fused_conv_bn_kernel,
        out_shape=jax.ShapeDtypeStruct((n, c, rows_pad, LANES), jnp.float32),
        grid_spec=pltpu.PrefetchScalarGridSpec(
            num_scalar_prefetch=1,
            grid=grid,
            in_specs=[spec],
            out_specs=spec,
        ),
        compiler_params=pltpu.CompilerParams(
            dimension_semantics=("parallel", "parallel"),
            vmem_limit_bytes=vmem_limit),
    )(packed, x4)

    out = out.reshape(n, c, hw_pad)[:, :, :hw]
    return out.reshape(n, c, h, w)


# ---------------------------------------------------------------------------
# Parameter init (mimics Conv2d default-ish init + bn_weight_change buffers)
# ---------------------------------------------------------------------------
def init_params(key, num_channels=3):
    c = num_channels
    keys = jax.random.split(key, 10)
    bound = 1.0 / (c ** 0.5)
    wc = jax.random.uniform(keys[0], (c, c), jnp.float32, -bound, bound)  # 1x1 conv kernel
    cb = jax.random.uniform(keys[1], (c,), jnp.float32, -bound, bound)    # conv bias
    w1 = jax.random.uniform(keys[2], (c,), jnp.float32)
    b1 = jax.random.uniform(keys[3], (c,), jnp.float32)
    v1 = jnp.abs(jax.random.uniform(keys[4], (c,), jnp.float32))
    m1 = jax.random.uniform(keys[5], (c,), jnp.float32)
    w2 = jax.random.uniform(keys[6], (c,), jnp.float32)
    b2 = jax.random.uniform(keys[7], (c,), jnp.float32)
    v2 = jnp.abs(jax.random.uniform(keys[8], (c,), jnp.float32))
    m2 = jax.random.uniform(keys[9], (c,), jnp.float32)
    return (wc, cb, w1, b1, m1, v1, w2, b2, m2, v2)


def reference_forward(inp, params):
    """Pure-JAX unfused reference: conv1 -> bn -> bn2 -> + inp (eval-mode BN)."""
    wc, cb, w1, b1, m1, v1, w2, b2, m2, v2 = params

    def bn(x, wgt, bias, mean, var):
        r = lambda p: p.reshape(1, -1, 1, 1)
        return (x - r(mean)) / jnp.sqrt(r(var) + EPS) * r(wgt) + r(bias)

    x = jnp.einsum('oc,nchw->nohw', wc, inp) + cb.reshape(1, -1, 1, 1)
    x = bn(x, w1, b1, m1, v1)
    x = bn(x, w2, b2, m2, v2)
    return x + inp


if __name__ == "__main__":
    key = jax.random.PRNGKey(0)
    k_inp, k_par = jax.random.split(key)

    # Conv2d(3, 3, kernel_size=1) fixes C=3; small NCHW input (2, 3, 16, 16).
    inp = jax.random.normal(k_inp, (2, 3, 16, 16), dtype=jnp.float32)
    params = init_params(k_par, num_channels=3)

    out = jax.block_until_ready(create_model_3_forward(inp, params))
    ref = reference_forward(inp, params)

    assert out.shape == inp.shape
    # Folding reassociates the affine math; tolerance covers f32 rounding.
    assert jnp.allclose(out, ref, atol=1e-3, rtol=1e-4), "mismatch vs reference"

    print("KERNEL_OK")
</pallas_src>

<mosaic_0001>
module attributes {stable_mosaic.version = 11 : i64} {
  func.func @_fused_conv_bn_kernel(%arg0: i32, %arg1: i32, %arg2: memref<12xf32, #tpu.memory_space<smem>>, %arg3: memref<1x3x8x128xf32, #tpu.memory_space<vmem>>, %arg4: memref<1x3x8x128xf32, #tpu.memory_space<vmem>>) attributes {dimension_semantics = [#tpu.dimension_semantics<parallel>, #tpu.dimension_semantics<parallel>], iteration_bounds = array<i64: 2, 1>, scalar_prefetch = 1 : i64, scratch_operands = 0 : i64, tpu.core_type = #tpu.core_type<tc>, window_params = [{transform_indices = @transform_0, window_bounds = array<i64: 1, 3, 8, 128>}, {transform_indices = @transform_1, window_bounds = array<i64: 1, 3, 8, 128>}]} {
    %c0 = arith.constant 0 : index
    %0 = memref.load %arg2[%c0] : memref<12xf32, #tpu.memory_space<smem>>
    %c1 = arith.constant 1 : index
    %1 = memref.load %arg2[%c1] : memref<12xf32, #tpu.memory_space<smem>>
    %c2 = arith.constant 2 : index
    %2 = memref.load %arg2[%c2] : memref<12xf32, #tpu.memory_space<smem>>
    %c3 = arith.constant 3 : index
    %3 = memref.load %arg2[%c3] : memref<12xf32, #tpu.memory_space<smem>>
    %c4 = arith.constant 4 : index
    %4 = memref.load %arg2[%c4] : memref<12xf32, #tpu.memory_space<smem>>
    %c5 = arith.constant 5 : index
    %5 = memref.load %arg2[%c5] : memref<12xf32, #tpu.memory_space<smem>>
    %c6 = arith.constant 6 : index
    %6 = memref.load %arg2[%c6] : memref<12xf32, #tpu.memory_space<smem>>
    %c7 = arith.constant 7 : index
    %7 = memref.load %arg2[%c7] : memref<12xf32, #tpu.memory_space<smem>>
    %c8 = arith.constant 8 : index
    %8 = memref.load %arg2[%c8] : memref<12xf32, #tpu.memory_space<smem>>
    %c9 = arith.constant 9 : index
    %9 = memref.load %arg2[%c9] : memref<12xf32, #tpu.memory_space<smem>>
    %c10 = arith.constant 10 : index
    %10 = memref.load %arg2[%c10] : memref<12xf32, #tpu.memory_space<smem>>
    %c11 = arith.constant 11 : index
    %11 = memref.load %arg2[%c11] : memref<12xf32, #tpu.memory_space<smem>>
    %c0_0 = arith.constant 0 : index
    %c0_1 = arith.constant 0 : index
    %c0_2 = arith.constant 0 : index
    %c0_3 = arith.constant 0 : index
    %12 = vector.load %arg3[%c0_0, %c0_1, %c0_2, %c0_3] : memref<1x3x8x128xf32, #tpu.memory_space<vmem>>, vector<1x1x8x128xf32>
    %13 = vector.shape_cast %12 : vector<1x1x8x128xf32> to vector<8x128xf32>
    %c0_4 = arith.constant 0 : index
    %c1_5 = arith.constant 1 : index
    %c0_6 = arith.constant 0 : index
    %c0_7 = arith.constant 0 : index
    %14 = vector.load %arg3[%c0_4, %c1_5, %c0_6, %c0_7] : memref<1x3x8x128xf32, #tpu.memory_space<vmem>>, vector<1x1x8x128xf32>
    %15 = vector.shape_cast %14 : vector<1x1x8x128xf32> to vector<8x128xf32>
    %c0_8 = arith.constant 0 : index
    %c2_9 = arith.constant 2 : index
    %c0_10 = arith.constant 0 : index
    %c0_11 = arith.constant 0 : index
    %16 = vector.load %arg3[%c0_8, %c2_9, %c0_10, %c0_11] : memref<1x3x8x128xf32, #tpu.memory_space<vmem>>, vector<1x1x8x128xf32>
    %17 = vector.shape_cast %16 : vector<1x1x8x128xf32> to vector<8x128xf32>
    %18 = vector.broadcast %0 : f32 to vector<8x128xf32>
    %19 = arith.mulf %13, %18 : vector<8x128xf32>
    %20 = vector.broadcast %1 : f32 to vector<8x128xf32>
    %21 = arith.mulf %15, %20 : vector<8x128xf32>
    %22 = arith.addf %19, %21 : vector<8x128xf32>
    %23 = vector.broadcast %2 : f32 to vector<8x128xf32>
    %24 = arith.mulf %17, %23 : vector<8x128xf32>
    %25 = arith.addf %22, %24 : vector<8x128xf32>
    %26 = vector.broadcast %9 : f32 to vector<8x128xf32>
    %27 = arith.addf %25, %26 : vector<8x128xf32>
    %c0_12 = arith.constant 0 : index
    %c0_13 = arith.constant 0 : index
    %c0_14 = arith.constant 0 : index
    %c0_15 = arith.constant 0 : index
    %28 = vector.load %arg4[%c0_12, %c0_13, %c0_14, %c0_15] : memref<1x3x8x128xf32, #tpu.memory_space<vmem>>, vector<1x1x8x128xf32>
    %29 = vector.shape_cast %28 : vector<1x1x8x128xf32> to vector<8x128xf32>
    %30 = vector.shape_cast %27 : vector<8x128xf32> to vector<1x1x8x128xf32>
    tpu.vector_store %arg4[%c0_12, %c0_13, %c0_14, %c0_15], %30 {strides = array<i32>} : memref<1x3x8x128xf32, #tpu.memory_space<vmem>>, vector<1x1x8x128xf32>,
    %31 = vector.broadcast %3 : f32 to vector<8x128xf32>
    %32 = arith.mulf %13, %31 : vector<8x128xf32>
    %33 = vector.broadcast %4 : f32 to vector<8x128xf32>
    %34 = arith.mulf %15, %33 : vector<8x128xf32>
    %35 = arith.addf %32, %34 : vector<8x128xf32>
    %36 = vector.broadcast %5 : f32 to vector<8x128xf32>
    %37 = arith.mulf %17, %36 : vector<8x128xf32>
    %38 = arith.addf %35, %37 : vector<8x128xf32>
    %39 = vector.broadcast %10 : f32 to vector<8x128xf32>
    %40 = arith.addf %38, %39 : vector<8x128xf32>
    %c0_16 = arith.constant 0 : index
    %c1_17 = arith.constant 1 : index
    %c0_18 = arith.constant 0 : index
    %c0_19 = arith.constant 0 : index
    %41 = vector.load %arg4[%c0_16, %c1_17, %c0_18, %c0_19] : memref<1x3x8x128xf32, #tpu.memory_space<vmem>>, vector<1x1x8x128xf32>
    %42 = vector.shape_cast %41 : vector<1x1x8x128xf32> to vector<8x128xf32>
    %43 = vector.shape_cast %40 : vector<8x128xf32> to vector<1x1x8x128xf32>
    tpu.vector_store %arg4[%c0_16, %c1_17, %c0_18, %c0_19], %43 {strides = array<i32>} : memref<1x3x8x128xf32, #tpu.memory_space<vmem>>, vector<1x1x8x128xf32>,
    %44 = vector.broadcast %6 : f32 to vector<8x128xf32>
    %45 = arith.mulf %13, %44 : vector<8x128xf32>
    %46 = vector.broadcast %7 : f32 to vector<8x128xf32>
    %47 = arith.mulf %15, %46 : vector<8x128xf32>
    %48 = arith.addf %45, %47 : vector<8x128xf32>
    %49 = vector.broadcast %8 : f32 to vector<8x128xf32>
    %50 = arith.mulf %17, %49 : vector<8x128xf32>
    %51 = arith.addf %48, %50 : vector<8x128xf32>
    %52 = vector.broadcast %11 : f32 to vector<8x128xf32>
    %53 = arith.addf %51, %52 : vector<8x128xf32>
    %c0_20 = arith.constant 0 : index
    %c2_21 = arith.constant 2 : index
    %c0_22 = arith.constant 0 : index
    %c0_23 = arith.constant 0 : index
    %54 = vector.load %arg4[%c0_20, %c2_21, %c0_22, %c0_23] : memref<1x3x8x128xf32, #tpu.memory_space<vmem>>, vector<1x1x8x128xf32>
    %55 = vector.shape_cast %54 : vector<1x1x8x128xf32> to vector<8x128xf32>
    %56 = vector.shape_cast %53 : vector<8x128xf32> to vector<1x1x8x128xf32>
    tpu.vector_store %arg4[%c0_20, %c2_21, %c0_22, %c0_23], %56 {strides = array<i32>} : memref<1x3x8x128xf32, #tpu.memory_space<vmem>>, vector<1x1x8x128xf32>,
    return
  }
  func.func @transform_0(%arg0: i32, %arg1: i32, %arg2: memref<12xf32, #tpu.memory_space<smem>>) -> (i32, i32, i32, i32) {
    %c0_i32 = arith.constant 0 : i32
    %c0_i32_0 = arith.constant 0 : i32
    %c0_i32_1 = arith.constant 0 : i32
    return %arg0, %c0_i32, %arg1, %c0_i32_0 : i32, i32, i32, i32
  }
  func.func @transform_1(%arg0: i32, %arg1: i32, %arg2: memref<12xf32, #tpu.memory_space<smem>>) -> (i32, i32, i32, i32) {
    %c0_i32 = arith.constant 0 : i32
    %c0_i32_0 = arith.constant 0 : i32
    %c0_i32_1 = arith.constant 0 : i32
    return %arg0, %c0_i32, %arg1, %c0_i32_0 : i32, i32, i32, i32
  }
}

</mosaic_0001>

<llo_original>
// kernel: tpu_custom_call.1
$region0: #{tpu_custom_call.1}
  #allocation0 [shape = 'u32[]', space=smem, size = 0x4, offset = 0x4, fixed_abs, tag = 'smem constant byte address 0x4 - core index']
  #allocation1 [shape = 'u32[72,128]{1,0:T(1,128)}', space=vmem, size = 0x9000, scoped, tag = 'internal scratch']
  #allocation2 [shape = 's32[1]{0}', space=sflag, size = 0x4, scoped, tag = 'scoped memory for tpu_custom_call.1']
  #allocation3 [shape = 'u8[512]{0}', space=smem, size = 0x200, scoped, tag = 'prefetched SMEM operand 0']
  %s0 = inlined_call_operand.hbm [shape: f32[12], index: 0, kind: input, shape index: {}]
  %s1 = inlined_call_operand.hbm [shape: f32[2,3,8,128], index: 1, kind: input, shape index: {}]
  %s2 = inlined_call_operand.hbm [shape: f32[2,3,8,128], index: 2, kind: output, shape index: {}]
  %s3 = sld [smem:[#allocation0]]
  $region41: #{tpu_custom_call.1} parent=0
    _
  %s5 = ssub.s32 1, %s3
  %s6 = scalar_select 0, %s5, %s3
  %s8 = sshll.u32 %s0, 4
  %s9 = int_to_ptr.hbm [resolvable:$true] %s8
  %11 = dma.hbm_to_smem %s9, 16, [#allocation3], [#allocation2]
  %13 = dma.done [#allocation2], 16
  %14 = sfence
  $region1: #{tpu_custom_call.1} parent=0
    #allocation4 [shape = 'u8[24576]{0}', space=vmem, size = 0x6000, scoped, tag = 'input window, operand 1']
    #allocation5 [shape = 's32[2]{0}', space=sflag, size = 0x8, scoped, tag = 'scoped memory for tpu_custom_call.1']
    #allocation6 [shape = 's32[2]{0}', space=sflag, size = 0x8, scoped, tag = 'scoped memory for tpu_custom_call.1']
    #allocation7 [shape = 'u8[24576]{0}', space=vmem, size = 0x6000, scoped, tag = 'output window, operand 0']
    %15 = vsyncpa [#allocation5], 0
    %s16 = scalar_lea.sflag [#allocation5], 1
    %17 = vsyncpa %s16, 0
    %18 = vsyncpa [#allocation6], 0
    %s19 = scalar_lea.sflag [#allocation6], 1
    %20 = vsyncpa %s19, 0
    loop: start=0, step=1, limit=4
    $region2: #{tpu_custom_call.1} parent=1 // loop_pre_header
      _
    $region3: #{tpu_custom_call.1} parent=1 // loop_header
      %s22 = sphi 0, %s26
      %p23 = scmp.ge.s32.totalorder %s22, 4
      %s29 = sphi 0, %s41
      %s30 = sphi 0, %s37
      %s31 = sphi 0, %s29
      %s32 = sphi 0, %s30
      %s33 = sphi 0, %s31
      %s34 = sphi 0, %s32
      %s46 = sphi 0, %s48
      %s49 = sphi 0, %s46
      %s50 = sphi 0, %s49
      %s66 = sphi 0, %s50
      %s74 = sphi 0, %s76
      %s77 = sphi 0, %s74
      %s78 = sphi 0, %s77
      %s94 = sphi 0, %s78
    $region4: #{tpu_custom_call.1} parent=1 // loop_header_branch
      %25 = sbr.rel (%p23) target = $region8
    $region5: #{tpu_custom_call.1} parent=1 // loop_body
      %s27 = ssub.s32 %s22, 1
      %s28 = ssub.s32 %s22, 2
      %s35 = sadd.s32 1, %s30
      %p36 = scmp.ge.s32.totalorder %s35, 1
      %s37 = scalar_select %p36, 0, %s35
      %s38 = sadd.s32 1, %s29
      %s39 = scalar_select %p36, %s38, %s29
      %p40 = scmp.ge.s32.totalorder %s39, 2
      %s41 = scalar_select %p40, 0, %s39
      %s42 = ssub.s32 %s29, %s41
      %s43 = ssub.s32 %s30, %s37
      %s44 = sor.u32 %s42, %s43
      %p45 = scmp.eq.s32.totalorder %s44, 0
      %s47 = sadd.s32 %s46, 1
      %s48 = scalar_select %p45, %s46, %s47
      %p51 = pneg %p45
      %p52 = scmp.eq.s32.totalorder %s22, 1
      %p53 = por %p51, %p52
      %p54 = scmp.ne.s32.totalorder %s46, %s49
      %p55 = scmp.eq.s32.totalorder %s22, 0
      %p56 = por %p54, %p55
      %p57 = scmp.ne.s32.totalorder %s46, %s49
      %p58 = scmp.eq.s32.totalorder %s27, 1
      %p59 = por %p57, %p58
      %p60 = scmp.ne.s32.totalorder %s49, %s50
      %p61 = scmp.eq.s32.totalorder %s27, 0
      %p62 = por %p60, %p61
      %p63 = scmp.ne.s32.totalorder %s49, %s50
      %p64 = scmp.eq.s32.totalorder %s28, 1
      %p65 = por %p63, %p64
      %p67 = scmp.ne.s32.totalorder %s50, %s66
      %p68 = scmp.eq.s32.totalorder %s28, 0
      %p69 = por %p67, %p68
      %s70 = ssub.s32 %s29, %s41
      %s71 = ssub.s32 %s30, %s37
      %s72 = sor.u32 %s70, %s71
      %p73 = scmp.eq.s32.totalorder %s72, 0
      %s75 = sadd.s32 %s74, 1
      %s76 = scalar_select %p73, %s74, %s75
      %p79 = pneg %p73
      %p80 = scmp.eq.s32.totalorder %s22, 1
      %p81 = por %p79, %p80
      %p82 = scmp.ne.s32.totalorder %s74, %s77
      %p83 = scmp.eq.s32.totalorder %s22, 0
      %p84 = por %p82, %p83
      %p85 = scmp.ne.s32.totalorder %s74, %s77
      %p86 = scmp.eq.s32.totalorder %s27, 1
      %p87 = por %p85, %p86
      %p88 = scmp.ne.s32.totalorder %s77, %s78
      %p89 = scmp.eq.s32.totalorder %s27, 0
      %p90 = por %p88, %p89
      %p91 = scmp.ne.s32.totalorder %s77, %s78
      %p92 = scmp.eq.s32.totalorder %s28, 1
      %p93 = por %p91, %p92
      %p95 = scmp.ne.s32.totalorder %s78, %s94
      %p96 = scmp.eq.s32.totalorder %s28, 0
      %p97 = por %p95, %p96
      %p98 = scmp.le.s32.totalorder 1, %s22
      %p99 = scmp.lt.s32.totalorder %s22, 3
      %p100 = pnand %p98, %p99
      %p101 = pneg %p100
      // Predicated region
      $region9: #{tpu_custom_call.1} parent=5 // pred_check
        _
      $region10: #{tpu_custom_call.1} parent=5 // pred_check_branch
        %103 = sbr.rel (%p100) target = $region12
      $region11: #{tpu_custom_call.1} parent=5 // pred_region
        %s104 = ssub.s32 %s22, 1
      $region12: #{tpu_custom_call.1} parent=5 // pred_fallthru
        _
      %p105 = scmp.lt.s32.totalorder %s22, 2
      // Predicated region
      $region13: #{tpu_custom_call.1} parent=5 // pred_check
        %p106 = pneg %p105
      $region14: #{tpu_custom_call.1} parent=5 // pred_check_branch
        %108 = sbr.rel (%p106) target = $region16
      $region15: #{tpu_custom_call.1} parent=5 // pred_region
        // Predicated region
        $region17: #{tpu_custom_call.1} parent=15 // pred_check
          %p109 = pneg %p56
        $region18: #{tpu_custom_call.1} parent=15 // pred_check_branch
          %111 = sbr.rel (%p109) target = $region20
        $region19: #{tpu_custom_call.1} parent=15 // pred_region
          %s112 = sand.u32 %s46, 1
          %s113 = scalar_lea.sflag [#allocation5], %s112
          %s114 = sand.u32 %s46, 1
          %s115 = smul.addr %s114, 24
          %s116 = scalar_lea.vmem [#allocation4], %s115
          %118 = vsyncadd %s113, 0
          %s119 = smul.addr %s29, 3
          %s120 = sadd.s32 %s30, %s119
          %s121 = smul.addr %s120, 8
          %s122 = scalar_lea.hbm %s1, %s121
          %s123 = sshll.u32 %s122, 4
          %s124 = int_to_ptr.hbm [resolvable:$true] %s123
          %s125 = sshll.u32 %s116, 4
          %s126 = int_to_ptr.vmem [resolvable:$true] %s125
          %131 = dma.hbm_to_vmem [thread:$0]  %s124, 384, %s126, %s113, 128, 128, 8
        $region20: #{tpu_custom_call.1} parent=15 // pred_fallthru
          _
      $region16: #{tpu_custom_call.1} parent=5 // pred_fallthru
        _
      %p132 = scmp.le.s32.totalorder 1, %s22
      %p133 = scmp.lt.s32.totalorder %s22, 3
      %p134 = pnand %p132, %p133
      %p135 = pneg %p134
      // Predicated region
      $region21: #{tpu_custom_call.1} parent=5 // pred_check
        _
      $region22: #{tpu_custom_call.1} parent=5 // pred_check_branch
        %137 = sbr.rel (%p134) target = $region24
      $region23: #{tpu_custom_call.1} parent=5 // pred_region
        %s138 = ssub.s32 %s22, 1
        %s139 = sand.u32 %s49, 1
        %s140 = scalar_lea.sflag [#allocation5], %s139
        %s141 = sand.u32 %s49, 1
        %s142 = smul.addr %s141, 24
        %s143 = scalar_lea.vmem [#allocation4], %s142
        // Predicated region
        $region25: #{tpu_custom_call.1} parent=23 // pred_check
          %p144 = pneg %p62
        $region26: #{tpu_custom_call.1} parent=23 // pred_check_branch
          %146 = sbr.rel (%p144) target = $region28
        $region27: #{tpu_custom_call.1} parent=23 // pred_region
          %148 = dma.done %s140, 384
        $region28: #{tpu_custom_call.1} parent=23 // pred_fallthru
          _
        %s149 = sand.u32 %s49, 1
        %s150 = scalar_lea.sflag [#allocation5], %s149
        %s151 = sand.u32 %s49, 1
        %s152 = smul.addr %s151, 24
        %s153 = scalar_lea.vmem [#allocation4], %s152
        %p154 = pneg %p62
        %p155 = pneg %p59
        %p156 = pneg %p90
        %p157 = pneg %p87
        %s158 = sand.u32 %s77, 1
        %s159 = scalar_lea.sflag [#allocation6], %s158
        %s160 = sand.u32 %s77, 1
        %s161 = smul.addr %s160, 24
        %s162 = scalar_lea.vmem [#allocation7], %s161
        %s163 = sld [smem:[#allocation3]]
        %s164 = sld [smem:[#allocation3 + $0x1]]
        %s165 = sld [smem:[#allocation3 + $0x2]]
        %s166 = sld [smem:[#allocation3 + $0x3]]
        %s167 = sld [smem:[#allocation3 + $0x4]]
        %s168 = sld [smem:[#allocation3 + $0x5]]
        %s169 = sld [smem:[#allocation3 + $0x6]]
        %s170 = sld [smem:[#allocation3 + $0x7]]
        %s171 = sld [smem:[#allocation3 + $0x8]]
        %s172 = sld [smem:[#allocation3 + $0x9]]
        %s173 = sld [smem:[#allocation3 + $0xa]]
        %s174 = sld [smem:[#allocation3 + $0xb]]
        %v175 = vld [vmem:[%s143] sm:$0xff]
        %s176 = scalar_lea.vmem %s143, 8 [#allocation4]
        %v177 = vld [vmem:[%s176] sm:$0xff]
        %s178 = scalar_lea.vmem %s143, 16 [#allocation4]
        %v179 = vld [vmem:[%s178] sm:$0xff]
        %v180 = vstv %s163
        %v181 = vmul.f32 %v175, %v180
        %v182 = vstv %s164
        %v183 = vmul.f32 %v177, %v182
        %v184 = vadd.f32 %v181, %v183
        %v185 = vstv %s165
        %v186 = vmul.f32 %v179, %v185
        %v187 = vadd.f32 %v184, %v186
        %v188 = vstv %s172
        %v189 = vadd.f32 %v187, %v188
        %190 = vst [vmem:[%s162] sm:$0xff] %v189
        %v191 = vstv %s166
        %v192 = vmul.f32 %v175, %v191
        %v193 = vstv %s167
        %v194 = vmul.f32 %v177, %v193
        %v195 = vadd.f32 %v192, %v194
        %v196 = vstv %s168
        %v197 = vmul.f32 %v179, %v196
        %v198 = vadd.f32 %v195, %v197
        %v199 = vstv %s173
        %v200 = vadd.f32 %v198, %v199
        %s201 = scalar_lea.vmem %s162, 8 [#allocation7]
        %202 = vst [vmem:[%s201] sm:$0xff] %v200
        %v203 = vstv %s169
        %v204 = vmul.f32 %v175, %v203
        %v205 = vstv %s170
        %v206 = vmul.f32 %v177, %v205
        %v207 = vadd.f32 %v204, %v206
        %v208 = vstv %s171
        %v209 = vmul.f32 %v179, %v208
        %v210 = vadd.f32 %v207, %v209
        %v211 = vstv %s174
        %v212 = vadd.f32 %v210, %v211
        %s213 = scalar_lea.vmem %s162, 16 [#allocation7]
        %214 = vst [vmem:[%s213] sm:$0xff] %v212
        %s215 = sand.u32 %s77, 1
        %s216 = scalar_lea.sflag [#allocation6], %s215
        %s217 = sand.u32 %s77, 1
        %s218 = smul.addr %s217, 24
        %s219 = scalar_lea.vmem [#allocation7], %s218
        // Predicated region
        $region29: #{tpu_custom_call.1} parent=23 // pred_check
          %p220 = pneg %p87
        $region30: #{tpu_custom_call.1} parent=23 // pred_check_branch
          %222 = sbr.rel (%p220) target = $region32
        $region31: #{tpu_custom_call.1} parent=23 // pred_region
          %224 = vsyncadd %s216, 0
          %s225 = smul.addr %s31, 3
          %s226 = sadd.s32 %s32, %s225
          %s227 = smul.addr %s226, 8
          %s228 = scalar_lea.hbm %s2, %s227
          %s229 = sshll.u32 %s219, 4
          %s230 = int_to_ptr.vmem [resolvable:$true] %s229
          %s231 = sshll.u32 %s228, 4
          %s232 = int_to_ptr.hbm [resolvable:$true] %s231
          %237 = dma.vmem_to_hbm [thread:$0]  %s230, 384, %s232, %s216, 128, 128, 8
        $region32: #{tpu_custom_call.1} parent=23 // pred_fallthru
          _
      $region24: #{tpu_custom_call.1} parent=5 // pred_fallthru
        _
      %p238 = scmp.le.s32.totalorder 2, %s22
      // Predicated region
      $region33: #{tpu_custom_call.1} parent=5 // pred_check
        %p239 = pneg %p238
      $region34: #{tpu_custom_call.1} parent=5 // pred_check_branch
        %241 = sbr.rel (%p239) target = $region36
      $region35: #{tpu_custom_call.1} parent=5 // pred_region
        %s242 = ssub.s32 %s22, 2
        // Predicated region
        $region37: #{tpu_custom_call.1} parent=35 // pred_check
          %p243 = pneg %p93
        $region38: #{tpu_custom_call.1} parent=35 // pred_check_branch
          %245 = sbr.rel (%p243) target = $region40
        $region39: #{tpu_custom_call.1} parent=35 // pred_region
          %s246 = sand.u32 %s78, 1
          %s247 = scalar_lea.sflag [#allocation6], %s246
          %s248 = sand.u32 %s78, 1
          %s249 = smul.addr %s248, 24
          %s250 = scalar_lea.vmem [#allocation7], %s249
          %252 = dma.done %s247, 384
        $region40: #{tpu_custom_call.1} parent=35 // pred_fallthru
          _
      $region36: #{tpu_custom_call.1} parent=5 // pred_fallthru
        _
    $region6: #{tpu_custom_call.1} parent=1 // loop_footer
      %s26 = sadd.s32 1, %s22
    $region7: #{tpu_custom_call.1} parent=1 // loop_footer_branch
      %21 = sbr.rel target = $region3
    $region8: #{tpu_custom_call.1} parent=1 // loop_exit
      _
    %253 = vsyncpa [#allocation5], 1
    %s254 = scalar_lea.sflag [#allocation5], 1
    %255 = vsyncpa %s254, 1
    %256 = vsyncpa [#allocation6], 1
    %s257 = scalar_lea.sflag [#allocation6], 1
    %258 = vsyncpa %s257, 1

</llo_original>
